<compile_context>
chip_gen: v5e
topology: v5e:2x2
jax: 0.10.0
libtpu: 0.0.40
codegen_flags: <defaults>
</compile_context>

<pallas_src>
import functools

import jax
import jax.numpy as jnp
from jax.experimental import pallas as pl
from jax.experimental.pallas import tpu as pltpu

BN_EPS = 1e-5


def _cbr_kernel(x_ref, w_ref, m_ref, g_ref, b_ref, o_ref,
                xpf_ref, patch_ref, y_ref, sum_ref, ssq_ref,
                *, N, Cin, Cout, H, W):
    # x_ref    : (1, Cin, H*W)        this batch image, spatially flattened
    # w_ref    : (Cout, 9*Cin)        conv weights, K index = (dy*3+dx)*Cin + ci
    # m_ref    : (2, H*W)             column-validity masks (left / right taps)
    # g_ref/b_ref : (Cout, 1)         BN gamma / beta
    # o_ref    : (N, Cout, H*W)       resident output block (written on last step)
    # xpf_ref  : (Cin, H*W + 2*(W+1)) zero-bordered flat-padded image scratch
    # patch_ref: (9*Cin, H*W)         im2col patch matrix scratch
    # y_ref    : (N, Cout, H*W)       conv results for all batch images (VMEM resident)
    # sum_ref/ssq_ref : (Cout, 1)     running per-channel sum / sum of squares
    HW = H * W
    PAD = W + 1
    n = pl.program_id(0)

    @pl.when(n == 0)
    def _init():
        xpf_ref[...] = jnp.zeros_like(xpf_ref)   # zero border; interior rewritten each step
        sum_ref[...] = jnp.zeros_like(sum_ref)
        ssq_ref[...] = jnp.zeros_like(ssq_ref)

    # drop this image into the zero-bordered flat scratch (in-kernel "padding")
    xpf_ref[:, PAD:PAD + HW] = x_ref[0].astype(jnp.float32)

    mask_l = m_ref[0:1, :]                       # 0.0 where col == 0     (dx == 0 taps)
    mask_r = m_ref[1:2, :]                       # 0.0 where col == W-1   (dx == 2 taps)

    # im2col: 9 shifted (and column-masked) copies stacked along K -> (9*Cin, HW)
    for dy in range(3):
        for dx in range(3):
            off = PAD + (dy - 1) * W + (dx - 1)          # static offset
            s = xpf_ref[:, off:off + HW]                 # (Cin, HW)
            if dx == 0:
                s = s * mask_l
            elif dx == 2:
                s = s * mask_r
            tap = dy * 3 + dx
            patch_ref[tap * Cin:(tap + 1) * Cin, :] = s

    # one MXU matmul for all 9 taps: (Cout, 9*Cin) @ (9*Cin, HW) -> (Cout, HW)
    y = jnp.dot(w_ref[...].astype(jnp.float32), patch_ref[...],
                preferred_element_type=jnp.float32)
    y_ref[n] = y

    # single-pass BN batch statistics (accumulated during the conv epilogue)
    sum_ref[...] += jnp.sum(y, axis=1, keepdims=True)
    ssq_ref[...] += jnp.sum(y * y, axis=1, keepdims=True)

    @pl.when(n == N - 1)
    def _finalize():
        cnt = jnp.float32(N * HW)
        mean = sum_ref[...] / cnt                        # (Cout, 1)
        var = ssq_ref[...] / cnt - mean * mean           # biased variance
        inv = jax.lax.rsqrt(var + BN_EPS)
        scale = g_ref[...] * inv                         # (Cout, 1)
        shift = b_ref[...] - mean * scale                # (Cout, 1)
        out = y_ref[...] * scale[None, :, :] + shift[None, :, :]
        o_ref[...] = jnp.maximum(out, 0.0).astype(o_ref.dtype)   # lane-dense store


def cbr_block(x_nchw, w_oihw, gamma, beta):
    """NCHW in, NCHW out (matches the PyTorch module forward)."""
    N, Cin, H, W = x_nchw.shape
    Cout = w_oihw.shape[0]
    HW = H * W

    # free reshape (adjacent-dim merge), no activation transpose
    x_flat = x_nchw.reshape(N, Cin, HW).astype(jnp.float32)
    # OIHW -> (O, kH, kW, I) -> (Cout, 9*Cin); tiny one-time weight transform
    w2 = jnp.transpose(w_oihw, (0, 2, 3, 1)).reshape(Cout, 9 * Cin).astype(jnp.float32)
    g = gamma.reshape(Cout, 1).astype(jnp.float32)
    b = beta.reshape(Cout, 1).astype(jnp.float32)

    # column-validity masks for the flat-shifted im2col windows
    col = jnp.arange(HW, dtype=jnp.int32) % W
    masks = jnp.stack([(col != 0), (col != W - 1)]).astype(jnp.float32)   # (2, HW)

    kern = functools.partial(_cbr_kernel, N=N, Cin=Cin, Cout=Cout, H=H, W=W)
    out = pl.pallas_call(
        kern,
        out_shape=jax.ShapeDtypeStruct((N, Cout, HW), jnp.float32),
        grid_spec=pltpu.PrefetchScalarGridSpec(
            num_scalar_prefetch=0,
            grid=(N,),
            in_specs=[
                pl.BlockSpec((1, Cin, HW), lambda n: (n, 0, 0)),      # x
                pl.BlockSpec((Cout, 9 * Cin), lambda n: (0, 0)),       # weights
                pl.BlockSpec((2, HW), lambda n: (0, 0)),               # masks
                pl.BlockSpec((Cout, 1), lambda n: (0, 0)),             # gamma
                pl.BlockSpec((Cout, 1), lambda n: (0, 0)),             # beta
            ],
            out_specs=pl.BlockSpec((N, Cout, HW), lambda n: (0, 0, 0)),  # resident
            scratch_shapes=[
                pltpu.VMEM((Cin, HW + 2 * (W + 1)), jnp.float32),      # flat-padded image
                pltpu.VMEM((9 * Cin, HW), jnp.float32),                # im2col patches
                pltpu.VMEM((N, Cout, HW), jnp.float32),                # conv results
                pltpu.VMEM((Cout, 1), jnp.float32),                    # sum
                pltpu.VMEM((Cout, 1), jnp.float32),                    # sum of squares
            ],
        ),
        compiler_params=pltpu.CompilerParams(
            dimension_semantics=("arbitrary",)),   # batch-stat reduction over N
    )(x_flat, w2, masks, g, b)
    return out.reshape(N, Cout, H, W)              # free reshape back to NCHW


# ---------------------------------------------------------------------------
# Pure-JAX reference for sanity checking.
# ---------------------------------------------------------------------------
def cbr_reference(x_nchw, w_oihw, gamma, beta):
    y = jax.lax.conv_general_dilated(
        x_nchw.astype(jnp.float32), w_oihw.astype(jnp.float32),
        window_strides=(1, 1), padding="SAME",
        dimension_numbers=("NCHW", "OIHW", "NCHW"))
    mean = jnp.mean(y, axis=(0, 2, 3), keepdims=True)
    var = jnp.mean(jnp.square(y - mean), axis=(0, 2, 3), keepdims=True)
    out = ((y - mean) * jax.lax.rsqrt(var + BN_EPS)
           * gamma.reshape(1, -1, 1, 1) + beta.reshape(1, -1, 1, 1))
    return jnp.maximum(out, 0.0)


if __name__ == "__main__":
    key = jax.random.PRNGKey(0)
    k_x, k_w = jax.random.split(key)

    N, C_IN, C_OUT, H, W = 2, 4, 8, 16, 16

    # deterministic parameter init (shapes from nn.Conv2d / nn.BatchNorm2d)
    x = jax.random.normal(k_x, (N, C_IN, H, W), dtype=jnp.float32)
    conv_w = 0.1 * jax.random.normal(k_w, (C_OUT, C_IN, 3, 3), dtype=jnp.float32)
    bn_gamma = jnp.ones((C_OUT,), dtype=jnp.float32)   # PyTorch BN default weight
    bn_beta = jnp.zeros((C_OUT,), dtype=jnp.float32)   # PyTorch BN default bias

    out = jax.block_until_ready(cbr_block(x, conv_w, bn_gamma, bn_beta))
    ref = jax.block_until_ready(cbr_reference(x, conv_w, bn_gamma, bn_beta))

    assert out.shape == (N, C_OUT, H, W), out.shape
    assert bool(jnp.allclose(out, ref, atol=2e-4, rtol=2e-4)), "mismatch vs reference"

    print("KERNEL_OK")
</pallas_src>

<mosaic_0001>
module attributes {stable_mosaic.version = 11 : i64} {
  func.func @_cbr_kernel(%arg0: i32, %arg1: memref<1x4x256xf32, #tpu.memory_space<vmem>>, %arg2: memref<8x36xf32, #tpu.memory_space<vmem>>, %arg3: memref<2x256xf32, #tpu.memory_space<vmem>>, %arg4: memref<8x1xf32, #tpu.memory_space<vmem>>, %arg5: memref<8x1xf32, #tpu.memory_space<vmem>>, %arg6: memref<2x8x256xf32, #tpu.memory_space<vmem>>, %arg7: memref<4x290xf32, #tpu.memory_space<vmem>>, %arg8: memref<36x256xf32, #tpu.memory_space<vmem>>, %arg9: memref<2x8x256xf32, #tpu.memory_space<vmem>>, %arg10: memref<8x1xf32, #tpu.memory_space<vmem>>, %arg11: memref<8x1xf32, #tpu.memory_space<vmem>>) attributes {dimension_semantics = [#tpu.dimension_semantics<arbitrary>], iteration_bounds = array<i64: 2>, scalar_prefetch = 0 : i64, scratch_operands = 5 : i64, tpu.core_type = #tpu.core_type<tc>, window_params = [{transform_indices = @transform_0, window_bounds = array<i64: 1, 4, 256>}, {pipeline_mode = #tpu.pipeline_mode<synchronous>, transform_indices = @transform_1, window_bounds = array<i64: 8, 36>}, {pipeline_mode = #tpu.pipeline_mode<synchronous>, transform_indices = @transform_2, window_bounds = array<i64: 2, 256>}, {pipeline_mode = #tpu.pipeline_mode<synchronous>, transform_indices = @transform_3, window_bounds = array<i64: 8, 1>}, {pipeline_mode = #tpu.pipeline_mode<synchronous>, transform_indices = @transform_4, window_bounds = array<i64: 8, 1>}, {pipeline_mode = #tpu.pipeline_mode<synchronous>, transform_indices = @transform_5, window_bounds = array<i64: 2, 8, 256>}]} {
    %c0_i32 = arith.constant 0 : i32
    %0 = arith.cmpi eq, %arg0, %c0_i32 : i32
    %1 = arith.extui %0 : i1 to i32
    %c0_i32_0 = arith.constant 0 : i32
    %2 = arith.cmpi ne, %1, %c0_i32_0 : i32
    scf.if %2 {
      %cst_48 = arith.constant 0.000000e+00 : f32
      %59 = vector.broadcast %cst_48 : f32 to vector<4x290xf32>
      %c0_49 = arith.constant 0 : index
      %c0_50 = arith.constant 0 : index
      %60 = vector.load %arg7[%c0_49, %c0_50] : memref<4x290xf32, #tpu.memory_space<vmem>>, vector<4x290xf32>
      tpu.vector_store %arg7[%c0_49, %c0_50], %59 {strides = array<i32>} : memref<4x290xf32, #tpu.memory_space<vmem>>, vector<4x290xf32>,
      %cst_51 = arith.constant 0.000000e+00 : f32
      %61 = vector.broadcast %cst_51 : f32 to vector<8x1xf32>
      %c0_52 = arith.constant 0 : index
      %c0_53 = arith.constant 0 : index
      %62 = vector.load %arg10[%c0_52, %c0_53] : memref<8x1xf32, #tpu.memory_space<vmem>>, vector<8x1xf32>
      tpu.vector_store %arg10[%c0_52, %c0_53], %61 {strides = array<i32>} : memref<8x1xf32, #tpu.memory_space<vmem>>, vector<8x1xf32>,
      %cst_54 = arith.constant 0.000000e+00 : f32
      %63 = vector.broadcast %cst_54 : f32 to vector<8x1xf32>
      %c0_55 = arith.constant 0 : index
      %c0_56 = arith.constant 0 : index
      %64 = vector.load %arg11[%c0_55, %c0_56] : memref<8x1xf32, #tpu.memory_space<vmem>>, vector<8x1xf32>
      tpu.vector_store %arg11[%c0_55, %c0_56], %63 {strides = array<i32>} : memref<8x1xf32, #tpu.memory_space<vmem>>, vector<8x1xf32>,
    } else {
    }
    %c0 = arith.constant 0 : index
    %c0_1 = arith.constant 0 : index
    %c0_2 = arith.constant 0 : index
    %3 = vector.load %arg1[%c0, %c0_1, %c0_2] : memref<1x4x256xf32, #tpu.memory_space<vmem>>, vector<1x4x256xf32>
    %4 = vector.shape_cast %3 : vector<1x4x256xf32> to vector<4x256xf32>
    %c0_3 = arith.constant 0 : index
    %c17 = arith.constant 17 : index
    %5 = vector.load %arg7[%c0_3, %c17] : memref<4x290xf32, #tpu.memory_space<vmem>>, vector<4x256xf32>
    tpu.vector_store %arg7[%c0_3, %c17], %4 {strides = array<i32>} : memref<4x290xf32, #tpu.memory_space<vmem>>, vector<4x256xf32>,
    %c0_4 = arith.constant 0 : index
    %c0_5 = arith.constant 0 : index
    %6 = vector.load %arg3[%c0_4, %c0_5] : memref<2x256xf32, #tpu.memory_space<vmem>>, vector<1x256xf32>
    %c1 = arith.constant 1 : index
    %c0_6 = arith.constant 0 : index
    %7 = vector.load %arg3[%c1, %c0_6] : memref<2x256xf32, #tpu.memory_space<vmem>>, vector<1x256xf32>
    %c0_7 = arith.constant 0 : index
    %c0_8 = arith.constant 0 : index
    %8 = vector.load %arg7[%c0_7, %c0_8] : memref<4x290xf32, #tpu.memory_space<vmem>>, vector<4x256xf32>
    %9 = vector.broadcast %6 : vector<1x256xf32> to vector<4x256xf32>
    %10 = arith.mulf %8, %9 : vector<4x256xf32>
    %c0_9 = arith.constant 0 : index
    %c0_10 = arith.constant 0 : index
    %11 = vector.load %arg8[%c0_9, %c0_10] : memref<36x256xf32, #tpu.memory_space<vmem>>, vector<4x256xf32>
    tpu.vector_store %arg8[%c0_9, %c0_10], %10 {strides = array<i32>} : memref<36x256xf32, #tpu.memory_space<vmem>>, vector<4x256xf32>,
    %c0_11 = arith.constant 0 : index
    %c1_12 = arith.constant 1 : index
    %12 = vector.load %arg7[%c0_11, %c1_12] : memref<4x290xf32, #tpu.memory_space<vmem>>, vector<4x256xf32>
    %c4 = arith.constant 4 : index
    %c0_13 = arith.constant 0 : index
    %13 = vector.load %arg8[%c4, %c0_13] : memref<36x256xf32, #tpu.memory_space<vmem>>, vector<4x256xf32>
    tpu.vector_store %arg8[%c4, %c0_13], %12 {strides = array<i32>} : memref<36x256xf32, #tpu.memory_space<vmem>>, vector<4x256xf32>,
    %c0_14 = arith.constant 0 : index
    %c2 = arith.constant 2 : index
    %14 = vector.load %arg7[%c0_14, %c2] : memref<4x290xf32, #tpu.memory_space<vmem>>, vector<4x256xf32>
    %15 = vector.broadcast %7 : vector<1x256xf32> to vector<4x256xf32>
    %16 = arith.mulf %14, %15 : vector<4x256xf32>
    %c8 = arith.constant 8 : index
    %c0_15 = arith.constant 0 : index
    %17 = vector.load %arg8[%c8, %c0_15] : memref<36x256xf32, #tpu.memory_space<vmem>>, vector<4x256xf32>
    tpu.vector_store %arg8[%c8, %c0_15], %16 {strides = array<i32>} : memref<36x256xf32, #tpu.memory_space<vmem>>, vector<4x256xf32>,
    %c0_16 = arith.constant 0 : index
    %c16 = arith.constant 16 : index
    %18 = vector.load %arg7[%c0_16, %c16] : memref<4x290xf32, #tpu.memory_space<vmem>>, vector<4x256xf32>
    %19 = vector.broadcast %6 : vector<1x256xf32> to vector<4x256xf32>
    %20 = arith.mulf %18, %19 : vector<4x256xf32>
    %c12 = arith.constant 12 : index
    %c0_17 = arith.constant 0 : index
    %21 = vector.load %arg8[%c12, %c0_17] : memref<36x256xf32, #tpu.memory_space<vmem>>, vector<4x256xf32>
    tpu.vector_store %arg8[%c12, %c0_17], %20 {strides = array<i32>} : memref<36x256xf32, #tpu.memory_space<vmem>>, vector<4x256xf32>,
    %c0_18 = arith.constant 0 : index
    %c17_19 = arith.constant 17 : index
    %22 = vector.load %arg7[%c0_18, %c17_19] : memref<4x290xf32, #tpu.memory_space<vmem>>, vector<4x256xf32>
    %c16_20 = arith.constant 16 : index
    %c0_21 = arith.constant 0 : index
    %23 = vector.load %arg8[%c16_20, %c0_21] : memref<36x256xf32, #tpu.memory_space<vmem>>, vector<4x256xf32>
    tpu.vector_store %arg8[%c16_20, %c0_21], %22 {strides = array<i32>} : memref<36x256xf32, #tpu.memory_space<vmem>>, vector<4x256xf32>,
    %c0_22 = arith.constant 0 : index
    %c18 = arith.constant 18 : index
    %24 = vector.load %arg7[%c0_22, %c18] : memref<4x290xf32, #tpu.memory_space<vmem>>, vector<4x256xf32>
    %25 = vector.broadcast %7 : vector<1x256xf32> to vector<4x256xf32>
    %26 = arith.mulf %24, %25 : vector<4x256xf32>
    %c20 = arith.constant 20 : index
    %c0_23 = arith.constant 0 : index
    %27 = vector.load %arg8[%c20, %c0_23] : memref<36x256xf32, #tpu.memory_space<vmem>>, vector<4x256xf32>
    tpu.vector_store %arg8[%c20, %c0_23], %26 {strides = array<i32>} : memref<36x256xf32, #tpu.memory_space<vmem>>, vector<4x256xf32>,
    %c0_24 = arith.constant 0 : index
    %c32 = arith.constant 32 : index
    %28 = vector.load %arg7[%c0_24, %c32] : memref<4x290xf32, #tpu.memory_space<vmem>>, vector<4x256xf32>
    %29 = vector.broadcast %6 : vector<1x256xf32> to vector<4x256xf32>
    %30 = arith.mulf %28, %29 : vector<4x256xf32>
    %c24 = arith.constant 24 : index
    %c0_25 = arith.constant 0 : index
    %31 = vector.load %arg8[%c24, %c0_25] : memref<36x256xf32, #tpu.memory_space<vmem>>, vector<4x256xf32>
    tpu.vector_store %arg8[%c24, %c0_25], %30 {strides = array<i32>} : memref<36x256xf32, #tpu.memory_space<vmem>>, vector<4x256xf32>,
    %c0_26 = arith.constant 0 : index
    %c33 = arith.constant 33 : index
    %32 = vector.load %arg7[%c0_26, %c33] : memref<4x290xf32, #tpu.memory_space<vmem>>, vector<4x256xf32>
    %c28 = arith.constant 28 : index
    %c0_27 = arith.constant 0 : index
    %33 = vector.load %arg8[%c28, %c0_27] : memref<36x256xf32, #tpu.memory_space<vmem>>, vector<4x256xf32>
    tpu.vector_store %arg8[%c28, %c0_27], %32 {strides = array<i32>} : memref<36x256xf32, #tpu.memory_space<vmem>>, vector<4x256xf32>,
    %c0_28 = arith.constant 0 : index
    %c34 = arith.constant 34 : index
    %34 = vector.load %arg7[%c0_28, %c34] : memref<4x290xf32, #tpu.memory_space<vmem>>, vector<4x256xf32>
    %35 = vector.broadcast %7 : vector<1x256xf32> to vector<4x256xf32>
    %36 = arith.mulf %34, %35 : vector<4x256xf32>
    %c32_29 = arith.constant 32 : index
    %c0_30 = arith.constant 0 : index
    %37 = vector.load %arg8[%c32_29, %c0_30] : memref<36x256xf32, #tpu.memory_space<vmem>>, vector<4x256xf32>
    tpu.vector_store %arg8[%c32_29, %c0_30], %36 {strides = array<i32>} : memref<36x256xf32, #tpu.memory_space<vmem>>, vector<4x256xf32>,
    %c0_31 = arith.constant 0 : index
    %c0_32 = arith.constant 0 : index
    %38 = vector.load %arg2[%c0_31, %c0_32] : memref<8x36xf32, #tpu.memory_space<vmem>>, vector<8x36xf32>
    %c0_33 = arith.constant 0 : index
    %c0_34 = arith.constant 0 : index
    %39 = vector.load %arg8[%c0_33, %c0_34] : memref<36x256xf32, #tpu.memory_space<vmem>>, vector<36x256xf32>
    %cst = arith.constant dense<0.000000e+00> : vector<8x256xf32>
    %40 = tpu.matmul %38, %39, %cst {dimension_numbers = #tpu.dot_dimension_numbers<[1], [0], [0], [1], [0, 0, 1, 1], [], []>} : vector<8x36xf32>, vector<36x256xf32>, vector<8x256xf32> -> vector<8x256xf32>
    %41 = arith.index_cast %arg0 : i32 to index
    %c0_35 = arith.constant 0 : index
    %c0_36 = arith.constant 0 : index
    %42 = vector.load %arg9[%41, %c0_35, %c0_36] : memref<2x8x256xf32, #tpu.memory_space<vmem>>, vector<1x8x256xf32>
    %43 = vector.shape_cast %42 : vector<1x8x256xf32> to vector<8x256xf32>
    %44 = vector.shape_cast %40 : vector<8x256xf32> to vector<1x8x256xf32>
    tpu.vector_store %arg9[%41, %c0_35, %c0_36], %44 {strides = array<i32>} : memref<2x8x256xf32, #tpu.memory_space<vmem>>, vector<1x8x256xf32>,
    %c0_37 = arith.constant 0 : index
    %c0_38 = arith.constant 0 : index
    %45 = vector.load %arg10[%c0_37, %c0_38] : memref<8x1xf32, #tpu.memory_space<vmem>>, vector<8x1xf32>
    %cst_39 = arith.constant dense<0.000000e+00> : vector<8xf32>
    %46 = vector.multi_reduction <add>, %40, %cst_39 [1] : vector<8x256xf32> to vector<8xf32>
    %47 = vector.shape_cast %46 : vector<8xf32> to vector<8x1xf32>
    %48 = arith.addf %45, %47 : vector<8x1xf32>
    %c0_40 = arith.constant 0 : index
    %c0_41 = arith.constant 0 : index
    %49 = vector.load %arg10[%c0_40, %c0_41] : memref<8x1xf32, #tpu.memory_space<vmem>>, vector<8x1xf32>
    tpu.vector_store %arg10[%c0_40, %c0_41], %48 {strides = array<i32>} : memref<8x1xf32, #tpu.memory_space<vmem>>, vector<8x1xf32>,
    %c0_42 = arith.constant 0 : index
    %c0_43 = arith.constant 0 : index
    %50 = vector.load %arg11[%c0_42, %c0_43] : memref<8x1xf32, #tpu.memory_space<vmem>>, vector<8x1xf32>
    %51 = arith.mulf %40, %40 : vector<8x256xf32>
    %cst_44 = arith.constant dense<0.000000e+00> : vector<8xf32>
    %52 = vector.multi_reduction <add>, %51, %cst_44 [1] : vector<8x256xf32> to vector<8xf32>
    %53 = vector.shape_cast %52 : vector<8xf32> to vector<8x1xf32>
    %54 = arith.addf %50, %53 : vector<8x1xf32>
    %c0_45 = arith.constant 0 : index
    %c0_46 = arith.constant 0 : index
    %55 = vector.load %arg11[%c0_45, %c0_46] : memref<8x1xf32, #tpu.memory_space<vmem>>, vector<8x1xf32>
    tpu.vector_store %arg11[%c0_45, %c0_46], %54 {strides = array<i32>} : memref<8x1xf32, #tpu.memory_space<vmem>>, vector<8x1xf32>,
    %c1_i32 = arith.constant 1 : i32
    %56 = arith.cmpi eq, %arg0, %c1_i32 : i32
    %57 = arith.extui %56 : i1 to i32
    %c0_i32_47 = arith.constant 0 : i32
    %58 = arith.cmpi ne, %57, %c0_i32_47 : i32
    scf.if %58 {
      %c0_48 = arith.constant 0 : index
      %c0_49 = arith.constant 0 : index
      %59 = vector.load %arg10[%c0_48, %c0_49] : memref<8x1xf32, #tpu.memory_space<vmem>>, vector<8x1xf32>
      %cst_50 = arith.constant 5.120000e+02 : f32
      %60 = vector.broadcast %cst_50 : f32 to vector<8x1xf32>
      %61 = arith.divf %59, %60 : vector<8x1xf32>
      %c0_51 = arith.constant 0 : index
      %c0_52 = arith.constant 0 : index
      %62 = vector.load %arg11[%c0_51, %c0_52] : memref<8x1xf32, #tpu.memory_space<vmem>>, vector<8x1xf32>
      %cst_53 = arith.constant 5.120000e+02 : f32
      %63 = vector.broadcast %cst_53 : f32 to vector<8x1xf32>
      %64 = arith.divf %62, %63 : vector<8x1xf32>
      %65 = arith.mulf %61, %61 : vector<8x1xf32>
      %66 = arith.subf %64, %65 : vector<8x1xf32>
      %cst_54 = arith.constant 9.99999974E-6 : f32
      %67 = vector.broadcast %cst_54 : f32 to vector<8x1xf32>
      %68 = arith.addf %66, %67 : vector<8x1xf32>
      %69 = math.rsqrt %68 : vector<8x1xf32>
      %c0_55 = arith.constant 0 : index
      %c0_56 = arith.constant 0 : index
      %70 = vector.load %arg4[%c0_55, %c0_56] : memref<8x1xf32, #tpu.memory_space<vmem>>, vector<8x1xf32>
      %71 = arith.mulf %70, %69 : vector<8x1xf32>
      %c0_57 = arith.constant 0 : index
      %c0_58 = arith.constant 0 : index
      %72 = vector.load %arg5[%c0_57, %c0_58] : memref<8x1xf32, #tpu.memory_space<vmem>>, vector<8x1xf32>
      %73 = arith.mulf %61, %71 : vector<8x1xf32>
      %74 = arith.subf %72, %73 : vector<8x1xf32>
      %c0_59 = arith.constant 0 : index
      %c0_60 = arith.constant 0 : index
      %c0_61 = arith.constant 0 : index
      %75 = vector.load %arg9[%c0_59, %c0_60, %c0_61] : memref<2x8x256xf32, #tpu.memory_space<vmem>>, vector<2x8x256xf32>
      %76 = vector.shape_cast %71 : vector<8x1xf32> to vector<1x8x1xf32>
      %77 = vector.broadcast %76 : vector<1x8x1xf32> to vector<2x8x256xf32>
      %78 = arith.mulf %75, %77 : vector<2x8x256xf32>
      %79 = vector.shape_cast %74 : vector<8x1xf32> to vector<1x8x1xf32>
      %80 = vector.broadcast %79 : vector<1x8x1xf32> to vector<2x8x256xf32>
      %81 = arith.addf %78, %80 : vector<2x8x256xf32>
      %cst_62 = arith.constant 0.000000e+00 : f32
      %82 = vector.broadcast %cst_62 : f32 to vector<2x8x256xf32>
      %83 = arith.maximumf %81, %82 : vector<2x8x256xf32>
      %c0_63 = arith.constant 0 : index
      %c0_64 = arith.constant 0 : index
      %c0_65 = arith.constant 0 : index
      %84 = vector.load %arg6[%c0_63, %c0_64, %c0_65] : memref<2x8x256xf32, #tpu.memory_space<vmem>>, vector<2x8x256xf32>
      tpu.vector_store %arg6[%c0_63, %c0_64, %c0_65], %83 {strides = array<i32>} : memref<2x8x256xf32, #tpu.memory_space<vmem>>, vector<2x8x256xf32>,
    } else {
    }
    return
  }
  func.func @transform_0(%arg0: i32) -> (i32, i32, i32) {
    %c0_i32 = arith.constant 0 : i32
    %c0_i32_0 = arith.constant 0 : i32
    %c0_i32_1 = arith.constant 0 : i32
    return %arg0, %c0_i32, %c0_i32_0 : i32, i32, i32
  }
  func.func @transform_1(%arg0: i32) -> (i32, i32) {
    %c0_i32 = arith.constant 0 : i32
    %c0_i32_0 = arith.constant 0 : i32
    %c0_i32_1 = arith.constant 0 : i32
    return %c0_i32, %c0_i32_0 : i32, i32
  }
  func.func @transform_2(%arg0: i32) -> (i32, i32) {
    %c0_i32 = arith.constant 0 : i32
    %c0_i32_0 = arith.constant 0 : i32
    %c0_i32_1 = arith.constant 0 : i32
    return %c0_i32, %c0_i32_0 : i32, i32
  }
  func.func @transform_3(%arg0: i32) -> (i32, i32) {
    %c0_i32 = arith.constant 0 : i32
    %c0_i32_0 = arith.constant 0 : i32
    %c0_i32_1 = arith.constant 0 : i32
    return %c0_i32, %c0_i32_0 : i32, i32
  }
  func.func @transform_4(%arg0: i32) -> (i32, i32) {
    %c0_i32 = arith.constant 0 : i32
    %c0_i32_0 = arith.constant 0 : i32
    %c0_i32_1 = arith.constant 0 : i32
    return %c0_i32, %c0_i32_0 : i32, i32
  }
  func.func @transform_5(%arg0: i32) -> (i32, i32, i32) {
    %c0_i32 = arith.constant 0 : i32
    %c0_i32_0 = arith.constant 0 : i32
    %c0_i32_1 = arith.constant 0 : i32
    %c0_i32_2 = arith.constant 0 : i32
    return %c0_i32, %c0_i32_0, %c0_i32_1 : i32, i32, i32
  }
}

</mosaic_0001>

<llo_original>
// kernel: tpu_custom_call.1
$region0: #{tpu_custom_call.1}
  #allocation0 [shape = 'u32[]', space=smem, size = 0x4, offset = 0x4, fixed_abs, tag = 'smem constant byte address 0x4 - core index']
  #allocation1 [shape = 'u32[72,128]{1,0:T(1,128)}', space=vmem, size = 0x9000, scoped, tag = 'internal scratch']
  #allocation2 [shape = 'f32[4,290]{1,0:T(4,128)}', space=vmem, size = 0x1800, scoped, tag = 'scratch operand']
  #allocation3 [shape = 'f32[36,256]{1,0:T(8,128)}', space=vmem, size = 0xa000, scoped, tag = 'scratch operand']
  #allocation4 [shape = 'f32[2,8,256]{2,1,0:T(8,128)}', space=vmem, size = 0x4000, scoped, tag = 'scratch operand']
  #allocation5 [shape = 'f32[8,1]{1,0:T(8,128)}', space=vmem, size = 0x1000, scoped, tag = 'scratch operand']
  #allocation6 [shape = 'f32[8,1]{1,0:T(8,128)}', space=vmem, size = 0x1000, scoped, tag = 'scratch operand']
  %s0 = inlined_call_operand.vmem [shape: f32[2,4,256], index: 0, kind: input, shape index: {}]
  %s1 = inlined_call_operand.hbm [shape: f32[8,36], index: 1, kind: input, shape index: {}]
  %s2 = inlined_call_operand.hbm [shape: f32[2,256], index: 2, kind: input, shape index: {}]
  %s3 = inlined_call_operand.vmem [shape: f32[8,1], index: 3, kind: input, shape index: {}]
  %s4 = inlined_call_operand.vmem [shape: f32[8,1], index: 4, kind: input, shape index: {}]
  %s5 = inlined_call_operand.hbm [shape: f32[2,8,256], index: 5, kind: output, shape index: {}]
  %s6 = sld [smem:[#allocation0]]
  $region69: #{tpu_custom_call.1} parent=0
    _
  %s8 = ssub.s32 1, %s6
  %s9 = scalar_select 0, %s8, %s6
  $region1: #{tpu_custom_call.1} parent=0
    #allocation7 [shape = 'u8[4096]{0}', space=vmem, size = 0x1000, scoped, tag = 'input window, operand 1, single buffered']
    #allocation8 [shape = 's32[2]{0}', space=sflag, size = 0x8, scoped, tag = 'scoped memory for tpu_custom_call.1']
    #allocation9 [shape = 's32[2]{0}', space=sflag, size = 0x8, scoped, tag = 'scoped memory for tpu_custom_call.1']
    #allocation10 [shape = 'u8[2048]{0}', space=vmem, size = 0x800, scoped, tag = 'input window, operand 2, single buffered']
    #allocation11 [shape = 's32[1]{0}', space=sflag, size = 0x4, scoped, tag = 'scoped memory for tpu_custom_call.1']
    #allocation12 [shape = 'u8[16384]{0}', space=vmem, size = 0x4000, scoped, tag = 'output window, operand 0, single buffered']
    %10 = vsyncpa [#allocation8], 0
    %11 = vsyncpa [#allocation11], 0
    %12 = vsyncpa [#allocation9], 0
    loop: start=0, step=1, limit=4
    $region2: #{tpu_custom_call.1} parent=1 // loop_pre_header
      _
    $region3: #{tpu_custom_call.1} parent=1 // loop_header
      %s14 = sphi 0, %s18
      %p15 = scmp.ge.s32.totalorder %s14, 4
      %s24 = sphi 0, %s26
      %s27 = sphi 0, %s24
      %s28 = sphi 0, %s27
      %s44 = sphi 0, %s28
      %s48 = sphi 0, %s48
      %s50 = sphi 0, %s48
      %s51 = sphi 0, %s50
      %s65 = sphi 0, %s51
      %s69 = sphi 0, %s69
      %s71 = sphi 0, %s69
      %s72 = sphi 0, %s71
      %s86 = sphi 0, %s72
      %s90 = sphi 0, %s90
      %s92 = sphi 0, %s90
      %s93 = sphi 0, %s92
      %s107 = sphi 0, %s93
      %s111 = sphi 0, %s111
      %s113 = sphi 0, %s111
      %s114 = sphi 0, %s113
      %s128 = sphi 0, %s114
      %s132 = sphi 0, %s132
      %s134 = sphi 0, %s132
      %s135 = sphi 0, %s134
      %s149 = sphi 0, %s135
    $region4: #{tpu_custom_call.1} parent=1 // loop_header_branch
      %17 = sbr.rel (%p15) target = $region8
    $region5: #{tpu_custom_call.1} parent=1 // loop_body
      %s19 = ssub.s32 %s14, 1
      %s20 = ssub.s32 %s14, 2
      %s21 = sadd.s32 %s14, 1
      %s22 = ssub.s32 %s14, %s21
      %p23 = scmp.eq.s32.totalorder %s22, 0
      %s25 = sadd.s32 %s24, 1
      %s26 = scalar_select %p23, %s24, %s25
      %p29 = pneg %p23
      %p30 = scmp.eq.s32.totalorder %s14, 1
      %p31 = por %p29, %p30
      %p32 = scmp.ne.s32.totalorder %s24, %s27
      %p33 = scmp.eq.s32.totalorder %s14, 0
      %p34 = por %p32, %p33
      %p35 = scmp.ne.s32.totalorder %s24, %s27
      %p36 = scmp.eq.s32.totalorder %s19, 1
      %p37 = por %p35, %p36
      %p38 = scmp.ne.s32.totalorder %s27, %s28
      %p39 = scmp.eq.s32.totalorder %s19, 0
      %p40 = por %p38, %p39
      %p41 = scmp.ne.s32.totalorder %s27, %s28
      %p42 = scmp.eq.s32.totalorder %s20, 1
      %p43 = por %p41, %p42
      %p45 = scmp.ne.s32.totalorder %s28, %s44
      %p46 = scmp.eq.s32.totalorder %s20, 0
      %p47 = por %p45, %p46
      %s49 = sadd.s32 %s48, 1
      %p52 = scmp.eq.s32.totalorder %s14, 1
      %p53 = scmp.ne.s32.totalorder %s48, %s50
      %p54 = scmp.eq.s32.totalorder %s14, 0
      %p55 = por %p53, %p54
      %p56 = scmp.ne.s32.totalorder %s48, %s50
      %p57 = scmp.eq.s32.totalorder %s19, 1
      %p58 = por %p56, %p57
      %p59 = scmp.ne.s32.totalorder %s50, %s51
      %p60 = scmp.eq.s32.totalorder %s19, 0
      %p61 = por %p59, %p60
      %p62 = scmp.ne.s32.totalorder %s50, %s51
      %p63 = scmp.eq.s32.totalorder %s20, 1
      %p64 = por %p62, %p63
      %p66 = scmp.ne.s32.totalorder %s51, %s65
      %p67 = scmp.eq.s32.totalorder %s20, 0
      %p68 = por %p66, %p67
      %s70 = sadd.s32 %s69, 1
      %p73 = scmp.eq.s32.totalorder %s14, 1
      %p74 = scmp.ne.s32.totalorder %s69, %s71
      %p75 = scmp.eq.s32.totalorder %s14, 0
      %p76 = por %p74, %p75
      %p77 = scmp.ne.s32.totalorder %s69, %s71
      %p78 = scmp.eq.s32.totalorder %s19, 1
      %p79 = por %p77, %p78
      %p80 = scmp.ne.s32.totalorder %s71, %s72
      %p81 = scmp.eq.s32.totalorder %s19, 0
      %p82 = por %p80, %p81
      %p83 = scmp.ne.s32.totalorder %s71, %s72
      %p84 = scmp.eq.s32.totalorder %s20, 1
      %p85 = por %p83, %p84
      %p87 = scmp.ne.s32.totalorder %s72, %s86
      %p88 = scmp.eq.s32.totalorder %s20, 0
      %p89 = por %p87, %p88
      %s91 = sadd.s32 %s90, 1
      %p94 = scmp.eq.s32.totalorder %s14, 1
      %p95 = scmp.ne.s32.totalorder %s90, %s92
      %p96 = scmp.eq.s32.totalorder %s14, 0
      %p97 = por %p95, %p96
      %p98 = scmp.ne.s32.totalorder %s90, %s92
      %p99 = scmp.eq.s32.totalorder %s19, 1
      %p100 = por %p98, %p99
      %p101 = scmp.ne.s32.totalorder %s92, %s93
      %p102 = scmp.eq.s32.totalorder %s19, 0
      %p103 = por %p101, %p102
      %p104 = scmp.ne.s32.totalorder %s92, %s93
      %p105 = scmp.eq.s32.totalorder %s20, 1
      %p106 = por %p104, %p105
      %p108 = scmp.ne.s32.totalorder %s93, %s107
      %p109 = scmp.eq.s32.totalorder %s20, 0
      %p110 = por %p108, %p109
      %s112 = sadd.s32 %s111, 1
      %p115 = scmp.eq.s32.totalorder %s14, 1
      %p116 = scmp.ne.s32.totalorder %s111, %s113
      %p117 = scmp.eq.s32.totalorder %s14, 0
      %p118 = por %p116, %p117
      %p119 = scmp.ne.s32.totalorder %s111, %s113
      %p120 = scmp.eq.s32.totalorder %s19, 1
      %p121 = por %p119, %p120
      %p122 = scmp.ne.s32.totalorder %s113, %s114
      %p123 = scmp.eq.s32.totalorder %s19, 0
      %p124 = por %p122, %p123
      %p125 = scmp.ne.s32.totalorder %s113, %s114
      %p126 = scmp.eq.s32.totalorder %s20, 1
      %p127 = por %p125, %p126
      %p129 = scmp.ne.s32.totalorder %s114, %s128
      %p130 = scmp.eq.s32.totalorder %s20, 0
      %p131 = por %p129, %p130
      %s133 = sadd.s32 %s132, 1
      %p136 = scmp.eq.s32.totalorder %s14, 1
      %p137 = scmp.ne.s32.totalorder %s132, %s134
      %p138 = scmp.eq.s32.totalorder %s14, 0
      %p139 = por %p137, %p138
      %p140 = scmp.ne.s32.totalorder %s132, %s134
      %p141 = scmp.eq.s32.totalorder %s19, 1
      %p142 = por %p140, %p141
      %p143 = scmp.ne.s32.totalorder %s134, %s135
      %p144 = scmp.eq.s32.totalorder %s19, 0
      %p145 = por %p143, %p144
      %p146 = scmp.ne.s32.totalorder %s134, %s135
      %p147 = scmp.eq.s32.totalorder %s20, 1
      %p148 = por %p146, %p147
      %p150 = scmp.ne.s32.totalorder %s135, %s149
      %p151 = scmp.eq.s32.totalorder %s20, 0
      %p152 = por %p150, %p151
      %p153 = scmp.le.s32.totalorder 1, %s14
      %p154 = scmp.lt.s32.totalorder %s14, 3
      %p155 = pnand %p153, %p154
      %p156 = pneg %p155
      // Predicated region
      $region9: #{tpu_custom_call.1} parent=5 // pred_check
        _
      $region10: #{tpu_custom_call.1} parent=5 // pred_check_branch
        %158 = sbr.rel (%p155) target = $region12
      $region11: #{tpu_custom_call.1} parent=5 // pred_region
        %s159 = ssub.s32 %s14, 1
        // Predicated region
        $region13: #{tpu_custom_call.1} parent=11 // pred_check
          %p160 = pneg %p61
        $region14: #{tpu_custom_call.1} parent=11 // pred_check_branch
          %162 = sbr.rel (%p160) target = $region16
        $region15: #{tpu_custom_call.1} parent=11 // pred_region
          %164 = vsyncadd [#allocation8], 0
          %s166 = sshll.u32 %s1, 4
          %s167 = int_to_ptr.hbm [resolvable:$true] %s166
          %s168 = sshll.u32 [#allocation7], 4
          %s169 = int_to_ptr.vmem [resolvable:$true] %s168
          %171 = dma.hbm_to_vmem [thread:$0]  %s167, 128, %s169, [#allocation8]
        $region16: #{tpu_custom_call.1} parent=11 // pred_fallthru
          _
        // Predicated region
        $region17: #{tpu_custom_call.1} parent=11 // pred_check
          %p172 = pneg %p82
        $region18: #{tpu_custom_call.1} parent=11 // pred_check_branch
          %174 = sbr.rel (%p172) target = $region20
        $region19: #{tpu_custom_call.1} parent=11 // pred_region
          %176 = vsyncadd [#allocation11], 0
          %s178 = sshll.u32 %s2, 4
          %s179 = int_to_ptr.hbm [resolvable:$true] %s178
          %s180 = sshll.u32 [#allocation10], 4
          %s181 = int_to_ptr.vmem [resolvable:$true] %s180
          %183 = dma.hbm_to_vmem [thread:$0]  %s179, 64, %s181, [#allocation11]
        $region20: #{tpu_custom_call.1} parent=11 // pred_fallthru
          _
        // Predicated region
        $region21: #{tpu_custom_call.1} parent=11 // pred_check
          %p184 = pneg %p103
        $region22: #{tpu_custom_call.1} parent=11 // pred_check_branch
          %186 = sbr.rel (%p184) target = $region24
        $region23: #{tpu_custom_call.1} parent=11 // pred_region
          _
        $region24: #{tpu_custom_call.1} parent=11 // pred_fallthru
          _
        // Predicated region
        $region25: #{tpu_custom_call.1} parent=11 // pred_check
          %p187 = pneg %p124
        $region26: #{tpu_custom_call.1} parent=11 // pred_check_branch
          %189 = sbr.rel (%p187) target = $region28
        $region27: #{tpu_custom_call.1} parent=11 // pred_region
          _
        $region28: #{tpu_custom_call.1} parent=11 // pred_fallthru
          _
      $region12: #{tpu_custom_call.1} parent=5 // pred_fallthru
        _
      %p190 = scmp.lt.s32.totalorder %s14, 2
      // Predicated region
      $region29: #{tpu_custom_call.1} parent=5 // pred_check
        %p191 = pneg %p190
      $region30: #{tpu_custom_call.1} parent=5 // pred_check_branch
        %193 = sbr.rel (%p191) target = $region32
      $region31: #{tpu_custom_call.1} parent=5 // pred_region
        // Predicated region
        $region33: #{tpu_custom_call.1} parent=31 // pred_check
          %p194 = pneg %p34
        $region34: #{tpu_custom_call.1} parent=31 // pred_check_branch
          %196 = sbr.rel (%p194) target = $region36
        $region35: #{tpu_custom_call.1} parent=31 // pred_region
          %p197 = scmp.lt.s32.totalorder %s14, 1
          %s198 = scalar_select %p197, %s14, 1
          %s199 = smul.addr %s198, 2
          %s200 = smul.addr %s199, 4
          %s201 = scalar_lea.vmem %s0, %s200
        $region36: #{tpu_custom_call.1} parent=31 // pred_fallthru
          _
      $region32: #{tpu_custom_call.1} parent=5 // pred_fallthru
        _
      %p202 = scmp.le.s32.totalorder 1, %s14
      %p203 = scmp.lt.s32.totalorder %s14, 3
      %p204 = pnand %p202, %p203
      %p205 = pneg %p204
      // Predicated region
      $region37: #{tpu_custom_call.1} parent=5 // pred_check
        _
      $region38: #{tpu_custom_call.1} parent=5 // pred_check_branch
        %207 = sbr.rel (%p204) target = $region40
      $region39: #{tpu_custom_call.1} parent=5 // pred_region
        %s208 = ssub.s32 %s14, 1
        // Predicated region
        $region41: #{tpu_custom_call.1} parent=39 // pred_check
          %p209 = pneg %p61
        $region42: #{tpu_custom_call.1} parent=39 // pred_check_branch
          %211 = sbr.rel (%p209) target = $region44
        $region43: #{tpu_custom_call.1} parent=39 // pred_region
          %213 = dma.done [#allocation8], 128
        $region44: #{tpu_custom_call.1} parent=39 // pred_fallthru
          _
        // Predicated region
        $region45: #{tpu_custom_call.1} parent=39 // pred_check
          %p214 = pneg %p82
        $region46: #{tpu_custom_call.1} parent=39 // pred_check_branch
          %216 = sbr.rel (%p214) target = $region48
        $region47: #{tpu_custom_call.1} parent=39 // pred_region
          %218 = dma.done [#allocation11], 64
        $region48: #{tpu_custom_call.1} parent=39 // pred_fallthru
          _
        %p219 = scmp.lt.s32.totalorder %s19, 1
        %s220 = scalar_select %p219, %s19, 1
        %s221 = smul.addr %s220, 2
        %s222 = smul.addr %s221, 4
        %s223 = scalar_lea.vmem %s0, %s222
        %p224 = pneg %p40
        %p225 = pneg %p37
        %p226 = pneg %p61
        %p227 = pneg %p58
        %p228 = pneg %p82
        %p229 = pneg %p79
        %p230 = pneg %p103
        %p231 = pneg %p100
        %p232 = pneg %p124
        %p233 = pneg %p121
        %p234 = pneg %p145
        %p235 = pneg %p142
        %p236 = scmp.lt.s32.totalorder %s19, 1
        %s237 = scalar_select %p236, %s19, 1
        %s238 = smul.addr %s237, 2
        %s239 = smul.addr %s238, 4
        %s240 = scalar_lea.vmem %s0, %s239
        %p241 = scmp.eq.s32.totalorder %s19, 0
        // Predicated region
        $region49: #{tpu_custom_call.1} parent=39 // pred_check
          %p242 = pneg %p241
        $region50: #{tpu_custom_call.1} parent=39 // pred_check_branch
          %244 = sbr.rel (%p242) target = $region52
        $region51: #{tpu_custom_call.1} parent=39 // pred_region
          %245 = vst [vmem:[#allocation2] sm:$0xff] 0.0
          %vm246 = vcmask 273408
          %247 = vst.msk [vmem:[#allocation2 + $0x8] sm:$0xf] %vm246, 0.0
          %vm248 = vcmask 7168
          %249 = vst.msk [vmem:[#allocation5] sm:$0xff] %vm248, 0.0
          %250 = vst.msk [vmem:[#allocation6] sm:$0xff] %vm248, 0.0
        $region52: #{tpu_custom_call.1} parent=39 // pred_fallthru
          _
        %v251 = vld [vmem:[%s240] sm:$0xff]
        %253 = vrot.lane.b32.xlu0 %v251, 17
        %v254 = vpop.permute.xlu0 %253
        %v255 = vrot.slane %v254, 4
        %vm256 = vcmask 138240
        %v257 = vsel %vm256, %v255, %v254
        %vm260 = vcmask 1043592
        %vm261 = vcmask 1047556
        %vm262 = vmor %vm261, %vm260
        %263 = vst.msk [vmem:[#allocation2] sm:$0xff] %vm262, %v257
        %vm264 = vcmask 134144
        %265 = vst.msk [vmem:[#allocation2 + $0x8] sm:$0xf] %vm264, %v255
        %v266 = vld [vmem:[#allocation10] ss:$2 sm:$0x3]
        %s267 = scalar_lea.vmem [#allocation10], 1
        %v268 = vld [vmem:[%s267] ss:$2 sm:$0x3]
        %v269 = vld [vmem:[#allocation2] sm:$0xff]
        %v271 = vperm.slane %v266, 0
        %v272 = vperm.slane %v266, 1
        %v273 = vrot.slane %v272, 4
        %vm274 = vcmask 1043456
        %v275 = vsel %vm274, %v271, %v273
        %v277 = vmul.f32 %v269, %v275
        %279 = vst [vmem:[#allocation1] ss:$2 sm:$0xff] %v277
        %v280 = vld.sshfl [vmem:[#allocation1] sm:$0xff pattern:$0x75316420]
        %v281 = vld.sshfl [vmem:[#allocation1 + $0x8] sm:$0xff pattern:$0x75316420]
        %284 = vst [vmem:[#allocation3] sm:$0xf] %v280
        %285 = vst [vmem:[#allocation3 + $0x8] sm:$0xf] %v281
        %v286 = vld [vmem:[#allocation2] sm:$0xff]
        %v287 = vld [vmem:[#allocation2 + $0x8] sm:$0xf]
        %s290 = scalar_lea.vmem [#allocation1], 1
        %291 = vst [vmem:[%s290] ss:$2 sm:$0xff] %v286
        %s292 = scalar_lea.vmem [#allocation1], 17
        %293 = vst [vmem:[%s292] ss:$2 sm:$0xff] %v287
        %v294 = vld.sshfl [vmem:[#allocation1] sm:$0xff pattern:$0x75316420]
        %v295 = vld.sshfl [vmem:[#allocation1 + $0x8] sm:$0xff pattern:$0x75316420]
        %v296 = vld.sshfl [vmem:[#allocation1 + $0x10] sm:$0xff pattern:$0x75316420]
        %297 = vrot.lane.b32.xlu0 %v294, 127
        %v298 = vpop.permute.xlu0 %297
        %299 = vrot.lane.b32.xlu0 %v295, 127
        %v300 = vpop.permute.xlu0 %299
        %301 = vrot.lane.b32.xlu0 %v296, 127
        %v302 = vpop.permute.xlu0 %301
        %vm303 = vcmask 1039360
        %v304 = vsel %vm303, %v298, %v300
        %v305 = vsel %vm303, %v300, %v302
        %308 = vst [vmem:[#allocation3] sm:$0xf0] %v304
        %309 = vst [vmem:[#allocation3 + $0x8] sm:$0xf0] %v305
        %v310 = vld [vmem:[#allocation2] sm:$0xff]
        %v311 = vld [vmem:[#allocation2 + $0x8] sm:$0xf]
        %v313 = vperm.slane %v268, 0
        %v314 = vperm.slane %v268, 1
        %v315 = vrot.slane %v314, 4
        %v316 = vsel %vm274, %v313, %v315
        %317 = vrot.lane.b32.xlu0 %v316, 2
        %v318 = vpop.permute.xlu0 %317
        %v319 = vrot.slane %v318, 4
        %vm320 = vcmask 15360
        %v321 = vsel %vm320, %v319, %v318
        %v324 = vmul.f32 %v310, %v321
        %v325 = vmul.f32 %v311, %v319
        %328 = vst [vmem:[#allocation1] ss:$2 sm:$0xff] %v324
        %s329 = scalar_lea.vmem [#allocation1], 16
        %330 = vst [vmem:[%s329] ss:$2 sm:$0xff] %v325
        %v331 = vld.sshfl [vmem:[#allocation1] sm:$0xff pattern:$0x75316420]
        %v332 = vld.sshfl [vmem:[#allocation1 + $0x8] sm:$0xff pattern:$0x75316420]
        %v333 = vld.sshfl [vmem:[#allocation1 + $0x10] sm:$0xff pattern:$0x75316420]
        %334 = vrot.lane.b32.xlu0 %v331, 126
        %v335 = vpop.permute.xlu0 %334
        %336 = vrot.lane.b32.xlu0 %v332, 126
        %v337 = vpop.permute.xlu0 %336
        %338 = vrot.lane.b32.xlu0 %v333, 126
        %v339 = vpop.permute.xlu0 %338
        %vm340 = vcmask 1031168
        %v341 = vsel %vm340, %v335, %v337
        %v342 = vsel %vm340, %v337, %v339
        %345 = vst [vmem:[#allocation3 + $0x10] sm:$0xf] %v341
        %346 = vst [vmem:[#allocation3 + $0x18] sm:$0xf] %v342
        %v347 = vld [vmem:[#allocation2] sm:$0xff]
        %v348 = vld [vmem:[#allocation2 + $0x8] sm:$0xf]
        %349 = vrot.lane.b32.xlu0 %v275, 16
        %v350 = vpop.permute.xlu0 %349
        %v351 = vrot.slane %v350, 4
        %vm352 = vcmask 130048
        %v353 = vsel %vm352, %v351, %v350
        %v356 = vmul.f32 %v347, %v353
        %v357 = vmul.f32 %v348, %v351
        %s360 = scalar_lea.vmem [#allocation1], 1
        %361 = vst [vmem:[%s360] ss:$2 sm:$0xff] %v356
        %s362 = scalar_lea.vmem [#allocation1], 17
        %363 = vst [vmem:[%s362] ss:$2 sm:$0xff] %v357
        %v364 = vld.sshfl [vmem:[#allocation1] sm:$0xff pattern:$0x75316420]
        %v365 = vld.sshfl [vmem:[#allocation1 + $0x8] sm:$0xff pattern:$0x75316420]
        %v366 = vld.sshfl [vmem:[#allocation1 + $0x10] sm:$0xff pattern:$0x75316420]
        %367 = vrot.lane.b32.xlu0 %v364, 112
        %v368 = vpop.permute.xlu0 %367
        %369 = vrot.lane.b32.xlu0 %v365, 112
        %v370 = vpop.permute.xlu0 %369
        %371 = vrot.lane.b32.xlu0 %v366, 112
        %v372 = vpop.permute.xlu0 %371
        %vm373 = vcmask 916480
        %v374 = vsel %vm373, %v368, %v370
        %v375 = vsel %vm373, %v370, %v372
        %378 = vst [vmem:[#allocation3 + $0x10] sm:$0xf0] %v374
        %379 = vst [vmem:[#allocation3 + $0x18] sm:$0xf0] %v375
        %v380 = vld [vmem:[#allocation2] sm:$0xff]
        %v381 = vld [vmem:[#allocation2 + $0x8] sm:$0xf]
        %384 = vst [vmem:[#allocation1] ss:$2 sm:$0xff] %v380
        %s385 = scalar_lea.vmem [#allocation1], 16
        %386 = vst [vmem:[%s385] ss:$2 sm:$0xff] %v381
        %v387 = vld.sshfl [vmem:[#allocation1] sm:$0xff pattern:$0x75316420]
        %v388 = vld.sshfl [vmem:[#allocation1 + $0x8] sm:$0xff pattern:$0x75316420]
        %v389 = vld.sshfl [vmem:[#allocation1 + $0x10] sm:$0xff pattern:$0x75316420]
        %390 = vrot.lane.b32.xlu0 %v387, 111
        %v391 = vpop.permute.xlu0 %390
        %392 = vrot.lane.b32.xlu0 %v388, 111
        %v393 = vpop.permute.xlu0 %392
        %394 = vrot.lane.b32.xlu0 %v389, 111
        %v395 = vpop.permute.xlu0 %394
        %vm396 = vcmask 908288
        %v397 = vsel %vm396, %v391, %v393
        %v398 = vsel %vm396, %v393, %v395
        %401 = vst [vmem:[#allocation3 + $0x20] sm:$0xf] %v397
        %402 = vst [vmem:[#allocation3 + $0x28] sm:$0xf] %v398
        %v403 = vld [vmem:[#allocation2] sm:$0xff]
        %v404 = vld [vmem:[#allocation2 + $0x8] sm:$0xf]
        %405 = vrot.lane.b32.xlu0 %v316, 18
        %v406 = vpop.permute.xlu0 %405
        %v407 = vrot.slane %v406, 4
        %vm408 = vcmask 146432
        %v409 = vsel %vm408, %v407, %v406
        %v412 = vmul.f32 %v403, %v409
        %v413 = vmul.f32 %v404, %v407
        %s416 = scalar_lea.vmem [#allocation1], 1
        %417 = vst [vmem:[%s416] ss:$2 sm:$0xff] %v412
        %s418 = scalar_lea.vmem [#allocation1], 17
        %419 = vst [vmem:[%s418] ss:$2 sm:$0xff] %v413
        %v420 = vld.sshfl [vmem:[#allocation1] sm:$0xff pattern:$0x75316420]
        %v421 = vld.sshfl [vmem:[#allocation1 + $0x8] sm:$0xff pattern:$0x75316420]
        %v422 = vld.sshfl [vmem:[#allocation1 + $0x10] sm:$0xff pattern:$0x75316420]
        %423 = vrot.lane.b32.xlu0 %v420, 110
        %v424 = vpop.permute.xlu0 %423
        %425 = vrot.lane.b32.xlu0 %v421, 110
        %v426 = vpop.permute.xlu0 %425
        %427 = vrot.lane.b32.xlu0 %v422, 110
        %v428 = vpop.permute.xlu0 %427
        %vm429 = vcmask 900096
        %v430 = vsel %vm429, %v424, %v426
        %v431 = vsel %vm429, %v426, %v428
        %434 = vst [vmem:[#allocation3 + $0x20] sm:$0xf0] %v430
        %435 = vst [vmem:[#allocation3 + $0x28] sm:$0xf0] %v431
        %v436 = vld [vmem:[#allocation2] sm:$0xff]
        %v437 = vld [vmem:[#allocation2 + $0x8] sm:$0xf]
        %438 = vrot.lane.b32.xlu0 %v275, 32
        %v439 = vpop.permute.xlu0 %438
        %v440 = vrot.slane %v439, 4
        %vm441 = vcmask 261120
        %v442 = vsel %vm441, %v440, %v439
        %v445 = vmul.f32 %v436, %v442
        %v446 = vmul.f32 %v437, %v440
        %449 = vst [vmem:[#allocation1] ss:$2 sm:$0xff] %v445
        %s450 = scalar_lea.vmem [#allocation1], 16
        %451 = vst [vmem:[%s450] ss:$2 sm:$0xff] %v446
        %v452 = vld.sshfl [vmem:[#allocation1] sm:$0xff pattern:$0x75316420]
        %v453 = vld.sshfl [vmem:[#allocation1 + $0x8] sm:$0xff pattern:$0x75316420]
        %v454 = vld.sshfl [vmem:[#allocation1 + $0x10] sm:$0xff pattern:$0x75316420]
        %455 = vrot.lane.b32.xlu0 %v452, 96
        %v456 = vpop.permute.xlu0 %455
        %457 = vrot.lane.b32.xlu0 %v453, 96
        %v458 = vpop.permute.xlu0 %457
        %459 = vrot.lane.b32.xlu0 %v454, 96
        %v460 = vpop.permute.xlu0 %459
        %vm461 = vcmask 785408
        %v462 = vsel %vm461, %v456, %v458
        %v463 = vsel %vm461, %v458, %v460
        %466 = vst [vmem:[#allocation3 + $0x30] sm:$0xf] %v462
        %467 = vst [vmem:[#allocation3 + $0x38] sm:$0xf] %v463
        %v468 = vld [vmem:[#allocation2] sm:$0xff]
        %v469 = vld [vmem:[#allocation2 + $0x8] sm:$0xf]
        %s472 = scalar_lea.vmem [#allocation1], 1
        %473 = vst [vmem:[%s472] ss:$2 sm:$0xff] %v468
        %s474 = scalar_lea.vmem [#allocation1], 17
        %475 = vst [vmem:[%s474] ss:$2 sm:$0xff] %v469
        %v476 = vld.sshfl [vmem:[#allocation1] sm:$0xff pattern:$0x75316420]
        %v477 = vld.sshfl [vmem:[#allocation1 + $0x8] sm:$0xff pattern:$0x75316420]
        %v478 = vld.sshfl [vmem:[#allocation1 + $0x10] sm:$0xff pattern:$0x75316420]
        %479 = vrot.lane.b32.xlu0 %v476, 95
        %v480 = vpop.permute.xlu0 %479
        %481 = vrot.lane.b32.xlu0 %v477, 95
        %v482 = vpop.permute.xlu0 %481
        %483 = vrot.lane.b32.xlu0 %v478, 95
        %v484 = vpop.permute.xlu0 %483
        %vm485 = vcmask 777216
        %v486 = vsel %vm485, %v480, %v482
        %v487 = vsel %vm485, %v482, %v484
        %490 = vst [vmem:[#allocation3 + $0x30] sm:$0xf0] %v486
        %491 = vst [vmem:[#allocation3 + $0x38] sm:$0xf0] %v487
        %v492 = vld [vmem:[#allocation2] sm:$0xff]
        %v493 = vld [vmem:[#allocation2 + $0x8] sm:$0xf]
        %494 = vrot.lane.b32.xlu0 %v316, 34
        %v495 = vpop.permute.xlu0 %494
        %v496 = vrot.slane %v495, 4
        %vm497 = vcmask 277504
        %v498 = vsel %vm497, %v496, %v495
        %v501 = vmul.f32 %v492, %v498
        %v502 = vmul.f32 %v493, %v496
        %505 = vst [vmem:[#allocation1] ss:$2 sm:$0xff] %v501
        %s506 = scalar_lea.vmem [#allocation1], 16
        %507 = vst [vmem:[%s506] ss:$2 sm:$0xff] %v502
        %v508 = vld.sshfl [vmem:[#allocation1] sm:$0xff pattern:$0x75316420]
        %v509 = vld.sshfl [vmem:[#allocation1 + $0x8] sm:$0xff pattern:$0x75316420]
        %v510 = vld.sshfl [vmem:[#allocation1 + $0x10] sm:$0xff pattern:$0x75316420]
        %511 = vrot.lane.b32.xlu0 %v508, 94
        %v512 = vpop.permute.xlu0 %511
        %513 = vrot.lane.b32.xlu0 %v509, 94
        %v514 = vpop.permute.xlu0 %513
        %515 = vrot.lane.b32.xlu0 %v510, 94
        %v516 = vpop.permute.xlu0 %515
        %vm517 = vcmask 769024
        %v518 = vsel %vm517, %v512, %v514
        %v519 = vsel %vm517, %v514, %v516
        %522 = vst [vmem:[#allocation3 + $0x40] sm:$0xf] %v518
        %523 = vst [vmem:[#allocation3 + $0x48] sm:$0xf] %v519
        %v524 = vld [vmem:[#allocation7] sm:$0xff]
        %v525 = vld [vmem:[#allocation3] sm:$0xff]
        %v526 = vld [vmem:[#allocation3 + $0x8] sm:$0xff]
        %v527 = vld [vmem:[#allocation3 + $0x10] sm:$0xff]
        %v528 = vld [vmem:[#allocation3 + $0x18] sm:$0xff]
        %v529 = vld [vmem:[#allocation3 + $0x20] sm:$0xff]
        %v530 = vld [vmem:[#allocation3 + $0x28] sm:$0xff]
        %v531 = vld [vmem:[#allocation3 + $0x30] sm:$0xff]
        %v532 = vld [vmem:[#allocation3 + $0x38] sm:$0xff]
        %v533 = vld [vmem:[#allocation3 + $0x40] sm:$0xf]
        %v534 = vld [vmem:[#allocation3 + $0x48] sm:$0xf]
        %vm535 = vcmask 293888
        %v537 = vsel %vm535, %v524, 0
        %v540 = vsel %vm274, %v533, 0
        %v543 = vsel %vm274, %v534, 0
        %545 = vmatpush.msra.mxu0 0.0
        %546 = vmatpush.msra.mxu0 0.0
        %547 = vmatpush.msra.mxu0 0.0
        %548 = vmatpush.msra.mxu0 0.0
        %549 = vmatpush.msra.mxu0 0.0
        %550 = vmatpush.msra.mxu0 0.0
        %551 = vmatpush.msra.mxu0 0.0
        %552 = vmatpush.msra.mxu0 0.0
        %553 = vmatpush.msra.mxu0 0.0
        %554 = vmatpush.msra.mxu0 0.0
        %555 = vmatpush.msra.mxu0 0.0
        %556 = vmatpush.msra.mxu0 %v540
        %557 = vmatpush.msra.mxu0 %v531
        %558 = vmatpush.msra.mxu0 %v529
        %559 = vmatpush.msra.mxu0 %v527
        %560 = vmatpush.msra.mxu0 %v525
        %561 = vmatmul.f32.gmra.mxu0 %v537
        %v562 = vpop.f32.mrf.mxu0
        %v563 = vadd.f32 0.0, %v562
        %564 = vdwg.mxu0
        %565 = vmatpush.msra.mxu0 0.0
        %566 = vmatpush.msra.mxu0 0.0
        %567 = vmatpush.msra.mxu0 0.0
        %568 = vmatpush.msra.mxu0 0.0
        %569 = vmatpush.msra.mxu0 0.0
        %570 = vmatpush.msra.mxu0 0.0
        %571 = vmatpush.msra.mxu0 0.0
        %572 = vmatpush.msra.mxu0 0.0
        %573 = vmatpush.msra.mxu0 0.0
        %574 = vmatpush.msra.mxu0 0.0
        %575 = vmatpush.msra.mxu0 0.0
        %576 = vmatpush.msra.mxu0 %v543
        %577 = vmatpush.msra.mxu0 %v532
        %578 = vmatpush.msra.mxu0 %v530
        %579 = vmatpush.msra.mxu0 %v528
        %580 = vmatpush.msra.mxu0 %v526
        %581 = vmatmul.f32.gmra.mxu0 %v537
        %v582 = vpop.f32.mrf.mxu0
        %v583 = vadd.f32 0.0, %v582
        %584 = vdwg.mxu0
        %s585 = smul.u32 %s19, 2
        %s586 = smul.addr %s585, 8
        %s587 = scalar_lea.vmem [#allocation4], %s586
        %588 = vst [vmem:[%s587] sm:$0xff] %v563
        %589 = vst [vmem:[%s587 + $0x8] sm:$0xff] %v583
        %v590 = vld [vmem:[#allocation5] sm:$0xff]
        %v591 = vadd.f32 %v563, %v583
        %592 = vadd.xlane.f32.xlu0 %v591
        %v593 = vpop.xlane.xlu0 %592
        %v594 = vadd.f32 %v590, %v593
        %vm595 = vcmask 7168
        %596 = vst.msk [vmem:[#allocation5] sm:$0xff] %vm595, %v594
        %v597 = vld [vmem:[#allocation6] sm:$0xff]
        %v598 = vmul.f32 %v563, %v563
        %v599 = vmul.f32 %v583, %v583
        %v600 = vadd.f32 %v598, %v599
        %601 = vadd.xlane.f32.xlu0 %v600
        %v602 = vpop.xlane.xlu0 %601
        %v603 = vadd.f32 %v597, %v602
        %604 = vst.msk [vmem:[#allocation6] sm:$0xff] %vm595, %v603
        %p605 = scmp.eq.s32.totalorder %s19, 1
        // Predicated region
        $region53: #{tpu_custom_call.1} parent=39 // pred_check
          %p606 = pneg %p605
        $region54: #{tpu_custom_call.1} parent=39 // pred_check_branch
          %608 = sbr.rel (%p606) target = $region56
        $region55: #{tpu_custom_call.1} parent=39 // pred_region
          %v609 = vld [vmem:[#allocation5] sm:$0xff]
          %v610 = vrcp.pop 512.0
          %v611 = vmul.f32 512.0, %v610
          %v612 = vsub.f32 1.0, %v611
          %v613 = vmul.f32 %v610, %v612
          %v614 = vadd.f32 %v610, %v613
          %vm615 = vweird.f32 %v610
          %v616 = vsel %vm615, %v610, %v614
          %v617 = vmul.f32 %v609, %v616
          %v618 = vld [vmem:[#allocation6] sm:$0xff]
          %v619 = vmul.f32 %v618, %v616
          %v620 = vmul.f32 %v617, %v617
          %v621 = vsub.f32 %v619, %v620
          %v622 = vadd.f32 %v621, 1e-05
          %v623 = vrsqrt.pop %v622
          %v624 = vmul.f32 %v623, %v622
          %v625 = vmul.f32 %v624, %v623
          %v626 = vmul.f32 0.5, %v625
          %v627 = vsub.f32 1.5, %v626
          %v628 = vmul.f32 %v623, %v627
          %vm629 = vweird.f32 %v622
          %vm630 = vweird.f32 %v623
          %vm631 = vmor %vm629, %vm630
          %v632 = vsel %vm631, %v623, %v628
          %v633 = vld [vmem:[%s3] sm:$0xff]
          %v634 = vmul.f32 %v633, %v632
          %v635 = vld [vmem:[%s4] sm:$0xff]
          %v636 = vmul.f32 %v617, %v634
          %v637 = vsub.f32 %v635, %v636
          %v638 = vld [vmem:[#allocation4] sm:$0xff]
          %v639 = vld [vmem:[#allocation4 + $0x8] sm:$0xff]
          %v640 = vld [vmem:[#allocation4 + $0x10] sm:$0xff]
          %v641 = vld [vmem:[#allocation4 + $0x18] sm:$0xff]
          %643 = vset.pattern.permute.xlu0 0
          %644 = vperm.xlu0 %643, %v634
          %v645 = vpop.permute.xlu0 %644
          %v647 = vmul.f32 %v638, %v645
          %v648 = vmul.f32 %v639, %v645
          %v649 = vmul.f32 %v640, %v645
          %v650 = vmul.f32 %v641, %v645
          %652 = vset.pattern.permute.xlu0 0
          %653 = vperm.xlu0 %652, %v637
          %v654 = vpop.permute.xlu0 %653
          %v656 = vadd.f32 %v647, %v654
          %v657 = vadd.f32 %v648, %v654
          %v658 = vadd.f32 %v649, %v654
          %v659 = vadd.f32 %v650, %v654
          %v660 = vmax.f32 %v656, 0.0
          %v661 = vmax.f32 %v657, 0.0
          %v662 = vmax.f32 %v658, 0.0
          %v663 = vmax.f32 %v659, 0.0
          %664 = vst [vmem:[#allocation12] sm:$0xff] %v660
          %665 = vst [vmem:[#allocation12 + $0x8] sm:$0xff] %v661
          %666 = vst [vmem:[#allocation12 + $0x10] sm:$0xff] %v662
          %667 = vst [vmem:[#allocation12 + $0x18] sm:$0xff] %v663
        $region56: #{tpu_custom_call.1} parent=39 // pred_fallthru
          _
        // Predicated region
        $region57: #{tpu_custom_call.1} parent=39 // pred_check
          %p668 = pneg %p142
        $region58: #{tpu_custom_call.1} parent=39 // pred_check_branch
          %670 = sbr.rel (%p668) target = $region60
        $region59: #{tpu_custom_call.1} parent=39 // pred_region
          %672 = vsyncadd [#allocation9], 0
          %s673 = sshll.u32 [#allocation12], 4
          %s674 = int_to_ptr.vmem [resolvable:$true] %s673
          %s675 = sshll.u32 %s5, 4
          %s676 = int_to_ptr.hbm [resolvable:$true] %s675
          %681 = dma.vmem_to_hbm [thread:$0]  %s674, 512, %s676, [#allocation9], 256, 256, 16
        $region60: #{tpu_custom_call.1} parent=39 // pred_fallthru
          _
        // Predicated region
        $region61: #{tpu_custom_call.1} parent=39 // pred_check
          %p682 = pneg %p142
        $region62: #{tpu_custom_call.1} parent=39 // pred_check_branch
          %684 = sbr.rel (%p682) target = $region64
        $region63: #{tpu_custom_call.1} parent=39 // pred_region
          %686 = dma.done [#allocation9], 512
        $region64: #{tpu_custom_call.1} parent=39 // pred_fallthru
          _
      $region40: #{tpu_custom_call.1} parent=5 // pred_fallthru
        _
      %p687 = scmp.le.s32.totalorder 2, %s14
      // Predicated region
      $region65: #{tpu_custom_call.1} parent=5 // pred_check
        %p688 = pneg %p687
      $region66: #{tpu_custom_call.1} parent=5 // pred_check_branch
        %690 = sbr.rel (%p688) target = $region68
      $region67: #{tpu_custom_call.1} parent=5 // pred_region
        %s691 = ssub.s32 %s14, 2
      $region68: #{tpu_custom_call.1} parent=5 // pred_fallthru
        _
    $region6: #{tpu_custom_call.1} parent=1 // loop_footer
      %s18 = sadd.s32 1, %s14
    $region7: #{tpu_custom_call.1} parent=1 // loop_footer_branch
      %13 = sbr.rel target = $region3
    $region8: #{tpu_custom_call.1} parent=1 // loop_exit
      _
    %692 = vsyncpa [#allocation8], 1
    %s693 = scalar_lea.sflag [#allocation8], 1
    %694 = vsyncpa %s693, 1
    %695 = vsyncpa [#allocation11], 1
    %696 = vsyncpa [#allocation9], 1
    %s697 = scalar_lea.sflag [#allocation9], 1
    %698 = vsyncpa %s697, 1

</llo_original>
